<compile_context>
chip_gen: v7x
topology: tpu7x:2x2x1
jax: 0.10.0
libtpu: 0.0.40
codegen_flags: <defaults>
</compile_context>

<pallas_src>
import functools

import jax
import jax.numpy as jnp
from jax import lax
from jax.experimental import pallas as pl
from jax.experimental.pallas import tpu as pltpu


def _loss_tile_kernel(thr_ref, logits_ref, target_ref, pred_ref, part_ref, *,
                      batch_size, block_rows):
    """Per-tile CE / fuzzy-guidance partial sums + per-row argmax."""
    i = pl.program_id(0)

    logits = logits_ref[...].astype(jnp.float32)        # (TB, C) f32 compute
    target = target_ref[...]                            # (TB, 1) int32
    tb, num_classes = logits.shape

    thr = thr_ref[0]                                     # SMEM scalar threshold

    col = lax.broadcasted_iota(jnp.int32, (tb, num_classes), 1)     # class id
    row = lax.broadcasted_iota(jnp.int32, (tb, 1), 0) + i * block_rows
    valid = row < batch_size                             # mask rows past B

    # ---- row-wise stable log-sum-exp ----
    row_max = jnp.max(logits, axis=1, keepdims=True)                # (TB, 1)
    sum_exp = jnp.sum(jnp.exp(logits - row_max), axis=1, keepdims=True)
    lse = row_max + jnp.log(sum_exp)                                # (TB, 1)

    # ---- per-sample cross entropy (target >= C gathers 0 -> ce = lse; such
    #      rows are masked out of the "old" sum below) ----
    tgt_logit = jnp.sum(jnp.where(col == target, logits, 0.0),
                        axis=1, keepdims=True)                      # (TB, 1)
    ce = lse - tgt_logit                                            # (TB, 1)

    # ---- argmax (first index achieving the row max) ----
    pred = jnp.min(jnp.where(logits == row_max, col, num_classes),
                   axis=1, keepdims=True)                           # (TB, 1)
    pred_ref[...] = pred.astype(jnp.int32)

    # ---- masks for incremental branch ----
    mask_old = jnp.logical_and(valid, target < num_classes)
    mask_new = jnp.logical_and(valid, target >= num_classes)

    # softmax max-prob = exp(row_max - lse) = 1 / sum_exp (exact divide for
    # tight parity with the reference)
    max_prob = 1.0 / sum_exp
    fuzzy = jnp.maximum(max_prob - thr, 0.0)

    # ---- tile-local scalar partial sums ----
    sum_ce = jnp.sum(jnp.where(valid, ce, 0.0))          # all valid rows
    sum_old = jnp.sum(jnp.where(mask_old, ce, 0.0))
    n_old = jnp.sum(mask_old.astype(jnp.float32))
    sum_new = jnp.sum(jnp.where(mask_new, fuzzy, 0.0))
    n_new = jnp.sum(mask_new.astype(jnp.float32))

    # lane-dense (1, 8, 128) partials block: lanes 0..4 carry the 5 sums
    lane = lax.broadcasted_iota(jnp.int32, part_ref.shape, 2)
    part_ref[...] = (jnp.where(lane == 0, sum_ce, 0.0)
                     + jnp.where(lane == 1, sum_old, 0.0)
                     + jnp.where(lane == 2, n_old, 0.0)
                     + jnp.where(lane == 3, sum_new, 0.0)
                     + jnp.where(lane == 4, n_new, 0.0))


def _round_up(x, m):
    return ((x + m - 1) // m) * m


def _choose_block_rows(batch, num_classes):
    # Keep one f32 working copy of a logits block around ~1 MiB so that the
    # double-buffered input blocks plus the handful of in-kernel f32
    # temporaries stay well under scoped VMEM on every chip (incl. v7x).
    cap = (1 << 20) // max(4 * num_classes, 1)
    cap = max(8, (cap // 8) * 8)
    tb = min(cap, _round_up(batch, 8), 1024)
    return max(8, (tb // 8) * 8)


class TeacherIncrementalCrossEntropyLoss:
    """JAX/Pallas port of the PyTorch TeacherIncrementalCrossEntropyLoss."""

    def __init__(self, threshold=0.5, lambda_fuzzy=1.0):
        self.threshold = float(threshold)
        self.lambda_fuzzy = float(lambda_fuzzy)

    def __call__(self, logits, target, is_incremental):
        B, C = logits.shape
        tb = _choose_block_rows(B, C)
        num_tiles = pl.cdiv(B, tb)

        target2d = target.astype(jnp.int32).reshape(B, 1)
        thr = jnp.asarray([self.threshold], dtype=jnp.float32)   # SMEM scalar

        kernel = functools.partial(_loss_tile_kernel,
                                   batch_size=B, block_rows=tb)

        in_bytes = B * C * logits.dtype.itemsize
        cost = pl.CostEstimate(
            flops=8 * B * C,
            transcendentals=B * C,
            bytes_accessed=in_bytes + 8 * B + num_tiles * 8 * 128 * 4)

        pred, partials = pl.pallas_call(
            kernel,
            out_shape=(jax.ShapeDtypeStruct((B, 1), jnp.int32),
                       jax.ShapeDtypeStruct((num_tiles, 8, 128), jnp.float32)),
            grid=(num_tiles,),
            in_specs=[pl.BlockSpec(memory_space=pltpu.MemorySpace.SMEM),
                      pl.BlockSpec((tb, C), lambda i: (i, 0)),
                      pl.BlockSpec((tb, 1), lambda i: (i, 0))],
            out_specs=(pl.BlockSpec((tb, 1), lambda i: (i, 0)),
                       pl.BlockSpec((1, 8, 128), lambda i: (i, 0, 0))),
            compiler_params=pltpu.CompilerParams(
                dimension_semantics=("parallel",),
                vmem_limit_bytes=32 * 1024 * 1024),
            cost_estimate=cost,
        )(thr, logits, target2d)

        # tiny cross-tile reduction + divides in plain JAX
        sums = jnp.sum(partials[:, 0, :], axis=0)                 # (128,)
        sum_ce, sum_old, n_old, sum_new, n_new = (
            sums[0], sums[1], sums[2], sums[3], sums[4])

        pred_labels = pred.reshape(B)

        if not is_incremental:
            return sum_ce / jnp.float32(B), pred_labels

        loss_old = jnp.where(n_old > 0.0, sum_old / jnp.maximum(n_old, 1.0), 0.0)
        loss_new = jnp.where(n_new > 0.0, sum_new / jnp.maximum(n_new, 1.0), 0.0)
        total = loss_old + jnp.float32(self.lambda_fuzzy) * loss_new
        return total, pred_labels


# ---------------- pure-JAX reference for validation ----------------
def _reference(logits, target, is_incremental, threshold=0.5, lambda_fuzzy=1.0):
    logits = jnp.asarray(logits, jnp.float32)
    target = jnp.asarray(target, jnp.int32)
    B, C = logits.shape
    log_probs = jax.nn.log_softmax(logits, axis=1)
    pred = jnp.argmax(logits, axis=1).astype(jnp.int32)

    if not is_incremental:
        ce = -log_probs[jnp.arange(B), target]
        return jnp.mean(ce), pred

    mask_old = target < C
    mask_new = ~mask_old
    safe_t = jnp.where(mask_old, target, 0)
    ce = -log_probs[jnp.arange(B), safe_t]
    n_old = jnp.sum(mask_old)
    n_new = jnp.sum(mask_new)
    loss_old = jnp.where(n_old > 0,
                         jnp.sum(jnp.where(mask_old, ce, 0.0)) / jnp.maximum(n_old, 1),
                         0.0)
    max_probs = jnp.max(jax.nn.softmax(logits, axis=1), axis=1)
    fuzzy = jnp.maximum(max_probs - threshold, 0.0)
    loss_new = jnp.where(n_new > 0,
                         jnp.sum(jnp.where(mask_new, fuzzy, 0.0)) / jnp.maximum(n_new, 1),
                         0.0)
    return loss_old + lambda_fuzzy * loss_new, pred


if __name__ == "__main__":
    key = jax.random.PRNGKey(0)
    B, C = 8, 16
    logits = jax.random.normal(key, (B, C), dtype=jnp.float32)
    # mix of "old" (< C) and "new" (>= C) class labels
    target = jnp.array([0, 3, 15, 7, 20, 18, 2, 17], dtype=jnp.int32)

    loss_fn = TeacherIncrementalCrossEntropyLoss(threshold=0.5, lambda_fuzzy=1.0)

    # incremental branch (f32 logits)
    loss_inc, pred_inc = loss_fn(logits, target, is_incremental=True)
    # non-incremental branch (all-valid targets)
    target_std = jnp.mod(target, C)
    loss_std, pred_std = loss_fn(logits, target_std, is_incremental=False)
    # native-bf16 path: no wrapper upcast, kernel computes in f32
    logits_bf16 = logits.astype(jnp.bfloat16)
    loss_bf16, pred_bf16 = loss_fn(logits_bf16, target, is_incremental=True)

    jax.block_until_ready((loss_inc, pred_inc, loss_std, pred_std,
                           loss_bf16, pred_bf16))

    ref_inc, ref_pred_inc = _reference(logits, target, True)
    ref_std, ref_pred_std = _reference(logits, target_std, False)
    ref_bf16, ref_pred_bf16 = _reference(logits_bf16.astype(jnp.float32), target, True)

    assert jnp.allclose(loss_inc, ref_inc, atol=1e-5, rtol=1e-5), (loss_inc, ref_inc)
    assert jnp.allclose(loss_std, ref_std, atol=1e-5, rtol=1e-5), (loss_std, ref_std)
    assert jnp.allclose(loss_bf16, ref_bf16, atol=1e-4, rtol=1e-4), (loss_bf16, ref_bf16)
    assert jnp.array_equal(pred_inc, ref_pred_inc)
    assert jnp.array_equal(pred_std, ref_pred_std)
    assert jnp.array_equal(pred_bf16, ref_pred_bf16)

    print("KERNEL_OK")
</pallas_src>

<mosaic_0001>
module attributes {stable_mosaic.version = 11 : i64} {
  func.func @_loss_tile_kernel(%arg0: i32, %arg1: memref<1xf32, #tpu.memory_space<smem>>, %arg2: memref<8x16xf32, #tpu.memory_space<vmem>>, %arg3: memref<8x1xi32, #tpu.memory_space<vmem>>, %arg4: memref<8x1xi32, #tpu.memory_space<vmem>>, %arg5: memref<1x8x128xf32, #tpu.memory_space<vmem>>) attributes {dimension_semantics = [#tpu.dimension_semantics<parallel>], iteration_bounds = array<i64: 1>, scalar_prefetch = 0 : i64, scratch_operands = 0 : i64, tpu.core_type = #tpu.core_type<tc>, window_params = [{transform_indices = @transform_0, window_bounds = array<i64: 1>}, {transform_indices = @transform_1, window_bounds = array<i64: 8, 16>}, {transform_indices = @transform_2, window_bounds = array<i64: 8, 1>}, {transform_indices = @transform_3, window_bounds = array<i64: 8, 1>}, {transform_indices = @transform_4, window_bounds = array<i64: 1, 8, 128>}]} {
    %c0 = arith.constant 0 : index
    %c0_0 = arith.constant 0 : index
    %0 = vector.load %arg2[%c0, %c0_0] : memref<8x16xf32, #tpu.memory_space<vmem>>, vector<8x16xf32>
    %c0_1 = arith.constant 0 : index
    %c0_2 = arith.constant 0 : index
    %1 = vector.load %arg3[%c0_1, %c0_2] : memref<8x1xi32, #tpu.memory_space<vmem>>, vector<8x1xi32>
    %c0_3 = arith.constant 0 : index
    %2 = memref.load %arg1[%c0_3] : memref<1xf32, #tpu.memory_space<smem>>
    %3 = tpu.iota {dimensions = array<i32: 1>} : vector<8x16xi32>
    %4 = tpu.iota {dimensions = array<i32: 0>} : vector<8x1xi32>
    %c8_i32 = arith.constant 8 : i32
    %5 = arith.muli %arg0, %c8_i32 : i32
    %6 = vector.broadcast %5 : i32 to vector<8x1xi32>
    %7 = arith.addi %4, %6 : vector<8x1xi32>
    %c8_i32_4 = arith.constant 8 : i32
    %8 = vector.broadcast %c8_i32_4 : i32 to vector<8x1xi32>
    %9 = arith.cmpi slt, %7, %8 : vector<8x1xi32>
    %cst = arith.constant dense<0xFF800000> : vector<8xf32>
    %10 = vector.multi_reduction <maximumf>, %0, %cst [1] : vector<8x16xf32> to vector<8xf32>
    %11 = vector.shape_cast %10 : vector<8xf32> to vector<8x1xf32>
    %12 = vector.broadcast %11 : vector<8x1xf32> to vector<8x16xf32>
    %13 = arith.subf %0, %12 : vector<8x16xf32>
    %14 = math.exp %13 : vector<8x16xf32>
    %cst_5 = arith.constant dense<0.000000e+00> : vector<8xf32>
    %15 = vector.multi_reduction <add>, %14, %cst_5 [1] : vector<8x16xf32> to vector<8xf32>
    %16 = vector.shape_cast %15 : vector<8xf32> to vector<8x1xf32>
    %17 = math.log %16 : vector<8x1xf32>
    %18 = arith.addf %11, %17 : vector<8x1xf32>
    %19 = vector.broadcast %1 : vector<8x1xi32> to vector<8x16xi32>
    %20 = arith.cmpi eq, %3, %19 : vector<8x16xi32>
    %cst_6 = arith.constant 0.000000e+00 : f32
    %21 = vector.broadcast %cst_6 : f32 to vector<8x16xf32>
    %22 = arith.select %20, %0, %21 : vector<8x16xi1>, vector<8x16xf32>
    %cst_7 = arith.constant dense<0.000000e+00> : vector<8xf32>
    %23 = vector.multi_reduction <add>, %22, %cst_7 [1] : vector<8x16xf32> to vector<8xf32>
    %24 = vector.shape_cast %23 : vector<8xf32> to vector<8x1xf32>
    %25 = arith.subf %18, %24 : vector<8x1xf32>
    %26 = vector.broadcast %11 : vector<8x1xf32> to vector<8x16xf32>
    %27 = arith.cmpf oeq, %0, %26 : vector<8x16xf32>
    %c16_i32 = arith.constant 16 : i32
    %28 = vector.broadcast %c16_i32 : i32 to vector<8x16xi32>
    %29 = arith.select %27, %3, %28 : vector<8x16xi1>, vector<8x16xi32>
    %cst_8 = arith.constant dense<2147483647> : vector<8xi32>
    %30 = vector.multi_reduction <minsi>, %29, %cst_8 [1] : vector<8x16xi32> to vector<8xi32>
    %31 = vector.shape_cast %30 : vector<8xi32> to vector<8x1xi32>
    %c0_9 = arith.constant 0 : index
    %c0_10 = arith.constant 0 : index
    %32 = vector.load %arg4[%c0_9, %c0_10] : memref<8x1xi32, #tpu.memory_space<vmem>>, vector<8x1xi32>
    tpu.vector_store %arg4[%c0_9, %c0_10], %31 {strides = array<i32>} : memref<8x1xi32, #tpu.memory_space<vmem>>, vector<8x1xi32>,
    %c16_i32_11 = arith.constant 16 : i32
    %33 = vector.broadcast %c16_i32_11 : i32 to vector<8x1xi32>
    %34 = arith.cmpi slt, %1, %33 : vector<8x1xi32>
    %35 = arith.andi %9, %34 : vector<8x1xi1>
    %c16_i32_12 = arith.constant 16 : i32
    %36 = vector.broadcast %c16_i32_12 : i32 to vector<8x1xi32>
    %37 = arith.cmpi sge, %1, %36 : vector<8x1xi32>
    %38 = arith.andi %9, %37 : vector<8x1xi1>
    %cst_13 = arith.constant 1.000000e+00 : f32
    %39 = vector.broadcast %cst_13 : f32 to vector<8x1xf32>
    %40 = arith.divf %39, %16 : vector<8x1xf32>
    %41 = vector.broadcast %2 : f32 to vector<8x1xf32>
    %42 = arith.subf %40, %41 : vector<8x1xf32>
    %cst_14 = arith.constant 0.000000e+00 : f32
    %43 = vector.broadcast %cst_14 : f32 to vector<8x1xf32>
    %44 = arith.maximumf %42, %43 : vector<8x1xf32>
    %cst_15 = arith.constant 0.000000e+00 : f32
    %45 = vector.broadcast %cst_15 : f32 to vector<8x1xf32>
    %46 = arith.select %9, %25, %45 : vector<8x1xi1>, vector<8x1xf32>
    %47 = vector.shape_cast %46 : vector<8x1xf32> to vector<1x8x1xf32>
    %cst_16 = arith.constant dense<0.000000e+00> : vector<1xf32>
    %48 = vector.multi_reduction <add>, %47, %cst_16 [1, 2] : vector<1x8x1xf32> to vector<1xf32>
    %49 = vector.shape_cast %48 : vector<1xf32> to vector<1x1x1xf32>
    %50 = vector.extract %49[0, 0, 0] : f32 from vector<1x1x1xf32>
    %cst_17 = arith.constant 0.000000e+00 : f32
    %51 = vector.broadcast %cst_17 : f32 to vector<8x1xf32>
    %52 = arith.select %35, %25, %51 : vector<8x1xi1>, vector<8x1xf32>
    %53 = vector.shape_cast %52 : vector<8x1xf32> to vector<1x8x1xf32>
    %cst_18 = arith.constant dense<0.000000e+00> : vector<1xf32>
    %54 = vector.multi_reduction <add>, %53, %cst_18 [1, 2] : vector<1x8x1xf32> to vector<1xf32>
    %55 = vector.shape_cast %54 : vector<1xf32> to vector<1x1x1xf32>
    %56 = vector.extract %55[0, 0, 0] : f32 from vector<1x1x1xf32>
    %57 = arith.extui %35 : vector<8x1xi1> to vector<8x1xi32>
    %58 = arith.sitofp %57 : vector<8x1xi32> to vector<8x1xf32>
    %59 = vector.shape_cast %58 : vector<8x1xf32> to vector<1x8x1xf32>
    %cst_19 = arith.constant dense<0.000000e+00> : vector<1xf32>
    %60 = vector.multi_reduction <add>, %59, %cst_19 [1, 2] : vector<1x8x1xf32> to vector<1xf32>
    %61 = vector.shape_cast %60 : vector<1xf32> to vector<1x1x1xf32>
    %62 = vector.extract %61[0, 0, 0] : f32 from vector<1x1x1xf32>
    %cst_20 = arith.constant 0.000000e+00 : f32
    %63 = vector.broadcast %cst_20 : f32 to vector<8x1xf32>
    %64 = arith.select %38, %44, %63 : vector<8x1xi1>, vector<8x1xf32>
    %65 = vector.shape_cast %64 : vector<8x1xf32> to vector<1x8x1xf32>
    %cst_21 = arith.constant dense<0.000000e+00> : vector<1xf32>
    %66 = vector.multi_reduction <add>, %65, %cst_21 [1, 2] : vector<1x8x1xf32> to vector<1xf32>
    %67 = vector.shape_cast %66 : vector<1xf32> to vector<1x1x1xf32>
    %68 = vector.extract %67[0, 0, 0] : f32 from vector<1x1x1xf32>
    %69 = arith.extui %38 : vector<8x1xi1> to vector<8x1xi32>
    %70 = arith.sitofp %69 : vector<8x1xi32> to vector<8x1xf32>
    %71 = vector.shape_cast %70 : vector<8x1xf32> to vector<1x8x1xf32>
    %cst_22 = arith.constant dense<0.000000e+00> : vector<1xf32>
    %72 = vector.multi_reduction <add>, %71, %cst_22 [1, 2] : vector<1x8x1xf32> to vector<1xf32>
    %73 = vector.shape_cast %72 : vector<1xf32> to vector<1x1x1xf32>
    %74 = vector.extract %73[0, 0, 0] : f32 from vector<1x1x1xf32>
    %75 = tpu.iota {dimensions = array<i32: 2>} : vector<1x8x128xi32>
    %c0_i32 = arith.constant 0 : i32
    %76 = vector.broadcast %c0_i32 : i32 to vector<1x8x128xi32>
    %77 = arith.cmpi eq, %75, %76 : vector<1x8x128xi32>
    %cst_23 = arith.constant 0.000000e+00 : f32
    %78 = vector.broadcast %50 : f32 to vector<1x8x128xf32>
    %79 = vector.broadcast %cst_23 : f32 to vector<1x8x128xf32>
    %80 = arith.select %77, %78, %79 : vector<1x8x128xi1>, vector<1x8x128xf32>
    %c1_i32 = arith.constant 1 : i32
    %81 = vector.broadcast %c1_i32 : i32 to vector<1x8x128xi32>
    %82 = arith.cmpi eq, %75, %81 : vector<1x8x128xi32>
    %cst_24 = arith.constant 0.000000e+00 : f32
    %83 = vector.broadcast %56 : f32 to vector<1x8x128xf32>
    %84 = vector.broadcast %cst_24 : f32 to vector<1x8x128xf32>
    %85 = arith.select %82, %83, %84 : vector<1x8x128xi1>, vector<1x8x128xf32>
    %86 = arith.addf %80, %85 : vector<1x8x128xf32>
    %c2_i32 = arith.constant 2 : i32
    %87 = vector.broadcast %c2_i32 : i32 to vector<1x8x128xi32>
    %88 = arith.cmpi eq, %75, %87 : vector<1x8x128xi32>
    %cst_25 = arith.constant 0.000000e+00 : f32
    %89 = vector.broadcast %62 : f32 to vector<1x8x128xf32>
    %90 = vector.broadcast %cst_25 : f32 to vector<1x8x128xf32>
    %91 = arith.select %88, %89, %90 : vector<1x8x128xi1>, vector<1x8x128xf32>
    %92 = arith.addf %86, %91 : vector<1x8x128xf32>
    %c3_i32 = arith.constant 3 : i32
    %93 = vector.broadcast %c3_i32 : i32 to vector<1x8x128xi32>
    %94 = arith.cmpi eq, %75, %93 : vector<1x8x128xi32>
    %cst_26 = arith.constant 0.000000e+00 : f32
    %95 = vector.broadcast %68 : f32 to vector<1x8x128xf32>
    %96 = vector.broadcast %cst_26 : f32 to vector<1x8x128xf32>
    %97 = arith.select %94, %95, %96 : vector<1x8x128xi1>, vector<1x8x128xf32>
    %98 = arith.addf %92, %97 : vector<1x8x128xf32>
    %c4_i32 = arith.constant 4 : i32
    %99 = vector.broadcast %c4_i32 : i32 to vector<1x8x128xi32>
    %100 = arith.cmpi eq, %75, %99 : vector<1x8x128xi32>
    %cst_27 = arith.constant 0.000000e+00 : f32
    %101 = vector.broadcast %74 : f32 to vector<1x8x128xf32>
    %102 = vector.broadcast %cst_27 : f32 to vector<1x8x128xf32>
    %103 = arith.select %100, %101, %102 : vector<1x8x128xi1>, vector<1x8x128xf32>
    %104 = arith.addf %98, %103 : vector<1x8x128xf32>
    %c0_28 = arith.constant 0 : index
    %c0_29 = arith.constant 0 : index
    %c0_30 = arith.constant 0 : index
    %105 = vector.load %arg5[%c0_28, %c0_29, %c0_30] : memref<1x8x128xf32, #tpu.memory_space<vmem>>, vector<1x8x128xf32>
    tpu.vector_store %arg5[%c0_28, %c0_29, %c0_30], %104 {strides = array<i32>} : memref<1x8x128xf32, #tpu.memory_space<vmem>>, vector<1x8x128xf32>,
    return
  }
  func.func @transform_0(%arg0: i32) -> i32 {
    %c0_i32 = arith.constant 0 : i32
    %c0_i32_0 = arith.constant 0 : i32
    return %c0_i32 : i32
  }
  func.func @transform_1(%arg0: i32) -> (i32, i32) {
    %c0_i32 = arith.constant 0 : i32
    %c0_i32_0 = arith.constant 0 : i32
    return %arg0, %c0_i32 : i32, i32
  }
  func.func @transform_2(%arg0: i32) -> (i32, i32) {
    %c0_i32 = arith.constant 0 : i32
    %c0_i32_0 = arith.constant 0 : i32
    return %arg0, %c0_i32 : i32, i32
  }
  func.func @transform_3(%arg0: i32) -> (i32, i32) {
    %c0_i32 = arith.constant 0 : i32
    %c0_i32_0 = arith.constant 0 : i32
    return %arg0, %c0_i32 : i32, i32
  }
  func.func @transform_4(%arg0: i32) -> (i32, i32, i32) {
    %c0_i32 = arith.constant 0 : i32
    %c0_i32_0 = arith.constant 0 : i32
    %c0_i32_1 = arith.constant 0 : i32
    return %arg0, %c0_i32, %c0_i32_0 : i32, i32, i32
  }
}

</mosaic_0001>

<llo_original>
// kernel: tpu_custom_call.1
$region0: #{tpu_custom_call.1}
  #allocation0 [shape = 'u32[]', space=smem, size = 0x4, offset = 0x4, fixed_abs, tag = 'smem constant byte address 0x4 - core index']
  #allocation1 [shape = 'u32[144,128]{1,0:T(1,128)}', space=vmem, size = 0x12000, scoped, tag = 'internal scratch']
  #allocation2 [shape = 'f32[1]{0:T(128)S(6)}', space=smem, size = 0x200, scoped, tag = 'scoped memory for tpu_custom_call.1']
  %s0 = inlined_call_operand.<no memory space> [shape: f32[1], index: 0, kind: input, shape index: {}]
  %s1 = inlined_call_operand.vmem [shape: f32[8,16], index: 1, kind: input, shape index: {}]
  %s2 = inlined_call_operand.vmem [shape: s32[8,1], index: 2, kind: input, shape index: {}]
  %s3 = inlined_call_operand.vmem [shape: s32[8,1], index: 3, kind: output, shape index: {0}]
  %s4 = inlined_call_operand.hbm [shape: f32[1,8,128], index: 4, kind: output, shape index: {1}]
  %5 = xla_tuple %s3, %s4
  %s6 = sld [smem:[#allocation0]]
  $region30: #{tpu_custom_call.1} parent=0
    _
  %s8 = ssub.s32 1, %s6
  %s9 = scalar_select 0, %s8, %s6
  %10 = sst [smem:[#allocation2]] %s0
  $region1: #{tpu_custom_call.1} parent=0
    #allocation3 [shape = 'u8[4096]{0}', space=vmem, size = 0x1000, scoped, tag = 'output window, operand 1, single buffered']
    #allocation4 [shape = 's32[1]{0}', space=sflag, size = 0x4, scoped, tag = 'scoped memory for tpu_custom_call.1']
    %11 = vsyncpa [#allocation4], 0
    // Predicated region
    $region2: #{tpu_custom_call.1} parent=1 // pred_check
      _
    $region3: #{tpu_custom_call.1} parent=1 // pred_check_branch
      %13 = sbr.rel (0) target = $region5
    $region4: #{tpu_custom_call.1} parent=1 // pred_region
      _
    $region5: #{tpu_custom_call.1} parent=1 // pred_fallthru
      _
    // Predicated region
    $region6: #{tpu_custom_call.1} parent=1 // pred_check
      _
    $region7: #{tpu_custom_call.1} parent=1 // pred_check_branch
      %15 = sbr.rel (0) target = $region9
    $region8: #{tpu_custom_call.1} parent=1 // pred_region
      _
    $region9: #{tpu_custom_call.1} parent=1 // pred_fallthru
      _
    // Predicated region
    $region10: #{tpu_custom_call.1} parent=1 // pred_check
      _
    $region11: #{tpu_custom_call.1} parent=1 // pred_check_branch
      %17 = sbr.rel (0) target = $region13
    $region12: #{tpu_custom_call.1} parent=1 // pred_region
      _
    $region13: #{tpu_custom_call.1} parent=1 // pred_fallthru
      _
    %v18 = vld [vmem:[%s1] sm:$0xff]
    %v19 = vld [vmem:[%s2] sm:$0xff]
    %s20 = sld [smem:[#allocation2]]
    %v21 = vlaneseq
    %v22 = vand.u32 %v21, 127
    %v23 = vlaneseq
    %v24 = vshrl.u32 %v23, 7
    %s25 = smul.u32 0, 8
    %v26 = vstv %s25
    %v27 = vadd.s32 %v24, %v26
    %vm28 = vcmp.lt.s32.totalorder %v27, 8
    %vm29 = vcmask 130048
    %v30 = vsel %vm29, %v18, -inf
    %31 = vmax.xlane.f32.xlu0 %v30
    %v32 = vpop.xlane.xlu0 %31
    %v33 = vsub.f32 %v18, %v32
    %v34 = vmul.f32 %v33, 1.442695
    %v35 = vpow.pop %v34
    %v36 = vsel %vm29, %v35, 0.0
    %37 = vadd.xlane.f32.xlu0 %v36
    %v38 = vpop.xlane.xlu0 %37
    %v39 = vlog2.pop %v38
    %v40 = vmul.f32 %v39, 0.6931472
    %v41 = vadd.f32 %v32, %v40
    %42 = vset.pattern.permute.xlu0 0
    %43 = vperm.xlu0 %42, %v19
    %v44 = vpop.permute.xlu0 %43
    %vm45 = vcmp.eq.s32.totalorder %v22, %v44
    %v46 = vsel %vm45, %v18, 0.0
    %v47 = vsel %vm29, %v46, 0.0
    %48 = vadd.xlane.f32.xlu0 %v47
    %v49 = vpop.xlane.xlu0 %48
    %v50 = vsub.f32 %v41, %v49
    %vm51 = vcmp.eq.f32.partialorder %v18, %v32
    %v52 = vsel %vm51, %v22, 16
    %v53 = vsel %vm29, %v52, 2147483647
    %v54 = vand.u32 %v53, 65535
    %v55 = vshra.s32 %v53, 16
    %v56 = vcvt.s32.f32 %v54
    %v57 = vcvt.s32.f32 %v55
    %58 = vmin.xlane.f32.xlu0 %v57
    %v59 = vpop.xlane.xlu0 %58
    %vm60 = vcmp.eq.f32.partialorder %v57, %v59
    %v61 = vsel %vm60, %v56, inf
    %62 = vmin.xlane.f32.xlu0 %v61
    %v63 = vpop.xlane.xlu0 %62
    %v64 = vcvt.f32.s32 %v63
    %v65 = vcvt.f32.s32 %v59
    %v66 = vshll.u32 %v65, 16
    %v67 = vadd.s32 %v66, %v64
    %vm68 = vcmask 7168
    %69 = vst.msk [vmem:[%s3] sm:$0xff] %vm68, %v67
    %vm70 = vcmp.lt.s32.totalorder %v19, 16
    %vm71 = vmand %vm28, %vm70
    %vm72 = vcmp.ge.s32.totalorder %v19, 16
    %vm73 = vmand %vm28, %vm72
    %v74 = vrcp.pop %v38
    %v75 = vmul.f32 1.0, %v74
    %v76 = vstv %s20
    %v77 = vsub.f32 %v75, %v76
    %v78 = vmax.f32 %v77, 0.0
    %v79 = vsel %vm28, %v50, 0.0
    %v80 = vsel %vm68, %v79, 0.0
    %81 = vadd.xlane.f32.xlu0 %v80
    %v82 = vpop.xlane.xlu0 %81
    %v83 = vrot.slane %v82, 4
    %v84 = vadd.f32 %v82, %v83
    %v85 = vrot.slane %v84, 2
    %v86 = vadd.f32 %v84, %v85
    %v87 = vrot.slane %v86, 1
    %v88 = vadd.f32 %v86, %v87
    %s89 = vtos %v88
    %v90 = vsel %vm71, %v50, 0.0
    %v91 = vsel %vm68, %v90, 0.0
    %92 = vadd.xlane.f32.xlu0 %v91
    %v93 = vpop.xlane.xlu0 %92
    %v94 = vrot.slane %v93, 4
    %v95 = vadd.f32 %v93, %v94
    %v96 = vrot.slane %v95, 2
    %v97 = vadd.f32 %v95, %v96
    %v98 = vrot.slane %v97, 1
    %v99 = vadd.f32 %v97, %v98
    %s100 = vtos %v99
    %v101 = vsel %vm71, 1, 0
    %v102 = vcvt.s32.f32 %v101
    %v103 = vsel %vm68, %v102, 0.0
    %104 = vadd.xlane.f32.xlu0 %v103
    %v105 = vpop.xlane.xlu0 %104
    %v106 = vrot.slane %v105, 4
    %v107 = vadd.f32 %v105, %v106
    %v108 = vrot.slane %v107, 2
    %v109 = vadd.f32 %v107, %v108
    %v110 = vrot.slane %v109, 1
    %v111 = vadd.f32 %v109, %v110
    %s112 = vtos %v111
    %v113 = vsel %vm73, %v78, 0.0
    %v114 = vsel %vm68, %v113, 0.0
    %115 = vadd.xlane.f32.xlu0 %v114
    %v116 = vpop.xlane.xlu0 %115
    %v117 = vrot.slane %v116, 4
    %v118 = vadd.f32 %v116, %v117
    %v119 = vrot.slane %v118, 2
    %v120 = vadd.f32 %v118, %v119
    %v121 = vrot.slane %v120, 1
    %v122 = vadd.f32 %v120, %v121
    %s123 = vtos %v122
    %v124 = vsel %vm73, 1, 0
    %v125 = vcvt.s32.f32 %v124
    %v126 = vsel %vm68, %v125, 0.0
    %127 = vadd.xlane.f32.xlu0 %v126
    %v128 = vpop.xlane.xlu0 %127
    %v129 = vrot.slane %v128, 4
    %v130 = vadd.f32 %v128, %v129
    %v131 = vrot.slane %v130, 2
    %v132 = vadd.f32 %v130, %v131
    %v133 = vrot.slane %v132, 1
    %v134 = vadd.f32 %v132, %v133
    %s135 = vtos %v134
    %vm136 = vcmp.eq.s32.totalorder %v22, 0
    %v137 = vstv %s89
    %v138 = vsel %vm136, %v137, 0.0
    %vm139 = vcmp.eq.s32.totalorder %v22, 1
    %v140 = vstv %s100
    %v141 = vsel %vm139, %v140, 0.0
    %v142 = vadd.f32 %v138, %v141
    %vm143 = vcmp.eq.s32.totalorder %v22, 2
    %v144 = vstv %s112
    %v145 = vsel %vm143, %v144, 0.0
    %v146 = vadd.f32 %v142, %v145
    %vm147 = vcmp.eq.s32.totalorder %v22, 3
    %v148 = vstv %s123
    %v149 = vsel %vm147, %v148, 0.0
    %v150 = vadd.f32 %v146, %v149
    %vm151 = vcmp.eq.s32.totalorder %v22, 4
    %v152 = vstv %s135
    %v153 = vsel %vm151, %v152, 0.0
    %v154 = vadd.f32 %v150, %v153
    %155 = vst [vmem:[#allocation3] sm:$0xff] %v154
    // Predicated region
    $region14: #{tpu_custom_call.1} parent=1 // pred_check
      _
    $region15: #{tpu_custom_call.1} parent=1 // pred_check_branch
      %157 = sbr.rel (0) target = $region17
    $region16: #{tpu_custom_call.1} parent=1 // pred_region
      _
    $region17: #{tpu_custom_call.1} parent=1 // pred_fallthru
      _
    // Predicated region
    $region18: #{tpu_custom_call.1} parent=1 // pred_check
      _
    $region19: #{tpu_custom_call.1} parent=1 // pred_check_branch
      %159 = sbr.rel (0) target = $region21
    $region20: #{tpu_custom_call.1} parent=1 // pred_region
      %s161 = ssub.s32 128, 128
      %162 = vsyncadd [#allocation4], %s161
      %s164 = sshll.u32 [#allocation3], 4
      %s165 = int_to_ptr.vmem [resolvable:$true] %s164
      %167 = dma.vmem_to_hbm [thread:$0]  %s165, 128, %s4, [#allocation4]
    $region21: #{tpu_custom_call.1} parent=1 // pred_fallthru
      _
    // Predicated region
    $region22: #{tpu_custom_call.1} parent=1 // pred_check
      _
    $region23: #{tpu_custom_call.1} parent=1 // pred_check_branch
      %169 = sbr.rel (0) target = $region25
    $region24: #{tpu_custom_call.1} parent=1 // pred_region
      _
    $region25: #{tpu_custom_call.1} parent=1 // pred_fallthru
      _
    // Predicated region
    $region26: #{tpu_custom_call.1} parent=1 // pred_check
      _
    $region27: #{tpu_custom_call.1} parent=1 // pred_check_branch
      %171 = sbr.rel (0) target = $region29
    $region28: #{tpu_custom_call.1} parent=1 // pred_region
      %172 = dma.done [#allocation4], 128
    $region29: #{tpu_custom_call.1} parent=1 // pred_fallthru
      _
    %173 = vsyncpa [#allocation4], 1

</llo_original>
